<compile_context>
chip_gen: v5e
topology: v5e:2x2
jax: 0.10.0
libtpu: 0.0.40
codegen_flags: <defaults>
</compile_context>

<pallas_src>
import jax
import jax.numpy as jnp
from jax.experimental import pallas as pl
from jax.experimental.pallas import tpu as pltpu


def _round_up(n, m):
    return ((n + m - 1) // m) * m


def _mlp_kernel(xt_ref, w1t_ref, b1_ref, w2t_ref, b2_ref, w3t_ref, b3_ref, ot_ref):
    xt = xt_ref[...]                                                    # (4, TB) f32

    # fc1 + relu:  (16,4) @ (4,TB) -> (16,TB)
    h1 = jnp.dot(w1t_ref[...], xt, preferred_element_type=jnp.float32)
    h1 = jnp.maximum(h1 + b1_ref[...], 0.0)                             # bias (16,1) bcast over lanes

    # fc2 + relu:  (8,16) @ (16,TB) -> (8,TB)
    h2 = jnp.dot(w2t_ref[...], h1, preferred_element_type=jnp.float32)
    h2 = jnp.maximum(h2 + b2_ref[...], 0.0)

    # fc3 (no activation):  (3,8) @ (8,TB) -> (3,TB)
    h3 = jnp.dot(w3t_ref[...], h2, preferred_element_type=jnp.float32)
    ot_ref[...] = (h3 + b3_ref[...]).astype(ot_ref.dtype)


def mlp_forward(x, params, *, block_b=2048):
    """x: (B, 4) float32. params: dict of w1,b1,w2,b2,w3,b3 (PyTorch-style
    (in,out) weights, (1,out) biases).  Returns (B, 3) float32."""
    B = x.shape[0]

    # Batch tile: a multiple of 128 (lane width), capped at block_b.
    TB = min(_round_up(block_b, 128), _round_up(B, 128))
    B_pad = _round_up(B, TB)
    if B_pad != B:
        x = jnp.pad(x, ((0, B_pad - B), (0, 0)))

    # Lane-dense layout: batch on the last (lane) axis.
    xt = x.T                                   # (4, B_pad)
    w1t = params["w1"].T                       # (16, 4)
    w2t = params["w2"].T                       # (8, 16)
    w3t = params["w3"].T                       # (3, 8)
    b1 = params["b1"].T                        # (16, 1)
    b2 = params["b2"].T                        # (8, 1)
    b3 = params["b3"].T                        # (3, 1)

    grid = (B_pad // TB,)
    const = lambda a: pl.BlockSpec(a.shape, lambda i: (0, 0))   # VMEM-resident weights/biases

    out_t = pl.pallas_call(
        _mlp_kernel,
        out_shape=jax.ShapeDtypeStruct((3, B_pad), jnp.float32),
        grid=grid,
        in_specs=[
            pl.BlockSpec((4, TB), lambda i: (0, i)),            # x tile (double-buffered)
            const(w1t), const(b1),
            const(w2t), const(b2),
            const(w3t), const(b3),
        ],
        out_specs=pl.BlockSpec((3, TB), lambda i: (0, i)),      # lane-dense, unmasked stores
        compiler_params=pltpu.CompilerParams(
            dimension_semantics=("parallel",)),                  # megacore on v7x
    )(xt, w1t, b1, w2t, b2, w3t, b3)

    return out_t.T[:B]                                           # back to (B, 3)


def init_params(key):
    """Deterministic init mimicking PyTorch nn.Linear (uniform +/- 1/sqrt(fan_in))."""
    dims = [(4, 16), (16, 8), (8, 3)]
    params = {}
    for i, (fan_in, fan_out) in enumerate(dims, start=1):
        key, kw, kb = jax.random.split(key, 3)
        bound = 1.0 / (fan_in ** 0.5)
        params[f"w{i}"] = jax.random.uniform(
            kw, (fan_in, fan_out), jnp.float32, -bound, bound)
        params[f"b{i}"] = jax.random.uniform(
            kb, (1, fan_out), jnp.float32, -bound, bound)
    return params


def mlp_reference(x, params):
    h1 = jnp.maximum(x @ params["w1"] + params["b1"], 0.0)
    h2 = jnp.maximum(h1 @ params["w2"] + params["b2"], 0.0)
    return h2 @ params["w3"] + params["b3"]


if __name__ == "__main__":
    key = jax.random.PRNGKey(0)
    key, kx1, kx2 = jax.random.split(key, 3)
    params = init_params(key)

    # Small Iris-style batch (single grid step, padded to 128 lanes).
    B = 8
    x = jax.random.normal(kx1, (B, 4), dtype=jnp.float32)
    out = jax.block_until_ready(mlp_forward(x, params))
    ref = mlp_reference(x, params)
    assert out.shape == (B, 3)
    assert jnp.allclose(out, ref, atol=1e-5, rtol=1e-5), "mismatch vs reference (B=8)"

    # Larger, non-multiple batch to exercise grid tiling + tail padding.
    B2 = 300
    x2 = jax.random.normal(kx2, (B2, 4), dtype=jnp.float32)
    out2 = jax.block_until_ready(mlp_forward(x2, params, block_b=128))
    ref2 = mlp_reference(x2, params)
    assert out2.shape == (B2, 3)
    assert jnp.allclose(out2, ref2, atol=1e-5, rtol=1e-5), "mismatch vs reference (B=300)"

    print("KERNEL_OK")
</pallas_src>

<mosaic_0001>
module attributes {stable_mosaic.version = 11 : i64} {
  func.func @_mlp_kernel(%arg0: i32, %arg1: memref<4x128xf32, #tpu.memory_space<vmem>>, %arg2: memref<16x4xf32, #tpu.memory_space<vmem>>, %arg3: memref<16x1xf32, #tpu.memory_space<vmem>>, %arg4: memref<8x16xf32, #tpu.memory_space<vmem>>, %arg5: memref<8x1xf32, #tpu.memory_space<vmem>>, %arg6: memref<3x8xf32, #tpu.memory_space<vmem>>, %arg7: memref<3x1xf32, #tpu.memory_space<vmem>>, %arg8: memref<3x128xf32, #tpu.memory_space<vmem>>) attributes {dimension_semantics = [#tpu.dimension_semantics<parallel>], iteration_bounds = array<i64: 1>, scalar_prefetch = 0 : i64, scratch_operands = 0 : i64, tpu.core_type = #tpu.core_type<tc>, window_params = [{transform_indices = @transform_0, window_bounds = array<i64: 4, 128>}, {pipeline_mode = #tpu.pipeline_mode<synchronous>, transform_indices = @transform_1, window_bounds = array<i64: 16, 4>}, {pipeline_mode = #tpu.pipeline_mode<synchronous>, transform_indices = @transform_2, window_bounds = array<i64: 16, 1>}, {pipeline_mode = #tpu.pipeline_mode<synchronous>, transform_indices = @transform_3, window_bounds = array<i64: 8, 16>}, {pipeline_mode = #tpu.pipeline_mode<synchronous>, transform_indices = @transform_4, window_bounds = array<i64: 8, 1>}, {pipeline_mode = #tpu.pipeline_mode<synchronous>, transform_indices = @transform_5, window_bounds = array<i64: 3, 8>}, {pipeline_mode = #tpu.pipeline_mode<synchronous>, transform_indices = @transform_6, window_bounds = array<i64: 3, 1>}, {transform_indices = @transform_7, window_bounds = array<i64: 3, 128>}]} {
    %c0 = arith.constant 0 : index
    %c0_0 = arith.constant 0 : index
    %0 = vector.load %arg1[%c0, %c0_0] : memref<4x128xf32, #tpu.memory_space<vmem>>, vector<4x128xf32>
    %c0_1 = arith.constant 0 : index
    %c0_2 = arith.constant 0 : index
    %1 = vector.load %arg2[%c0_1, %c0_2] : memref<16x4xf32, #tpu.memory_space<vmem>>, vector<16x4xf32>
    %cst = arith.constant dense<0.000000e+00> : vector<16x128xf32>
    %2 = tpu.matmul %1, %0, %cst {dimension_numbers = #tpu.dot_dimension_numbers<[1], [0], [0], [1], [0, 0, 1, 1], [], []>} : vector<16x4xf32>, vector<4x128xf32>, vector<16x128xf32> -> vector<16x128xf32>
    %c0_3 = arith.constant 0 : index
    %c0_4 = arith.constant 0 : index
    %3 = vector.load %arg3[%c0_3, %c0_4] : memref<16x1xf32, #tpu.memory_space<vmem>>, vector<16x1xf32>
    %4 = vector.broadcast %3 : vector<16x1xf32> to vector<16x128xf32>
    %5 = arith.addf %2, %4 : vector<16x128xf32>
    %cst_5 = arith.constant 0.000000e+00 : f32
    %6 = vector.broadcast %cst_5 : f32 to vector<16x128xf32>
    %7 = arith.maximumf %5, %6 : vector<16x128xf32>
    %c0_6 = arith.constant 0 : index
    %c0_7 = arith.constant 0 : index
    %8 = vector.load %arg4[%c0_6, %c0_7] : memref<8x16xf32, #tpu.memory_space<vmem>>, vector<8x16xf32>
    %cst_8 = arith.constant dense<0.000000e+00> : vector<8x128xf32>
    %9 = tpu.matmul %8, %7, %cst_8 {dimension_numbers = #tpu.dot_dimension_numbers<[1], [0], [0], [1], [0, 0, 1, 1], [], []>} : vector<8x16xf32>, vector<16x128xf32>, vector<8x128xf32> -> vector<8x128xf32>
    %c0_9 = arith.constant 0 : index
    %c0_10 = arith.constant 0 : index
    %10 = vector.load %arg5[%c0_9, %c0_10] : memref<8x1xf32, #tpu.memory_space<vmem>>, vector<8x1xf32>
    %11 = vector.broadcast %10 : vector<8x1xf32> to vector<8x128xf32>
    %12 = arith.addf %9, %11 : vector<8x128xf32>
    %cst_11 = arith.constant 0.000000e+00 : f32
    %13 = vector.broadcast %cst_11 : f32 to vector<8x128xf32>
    %14 = arith.maximumf %12, %13 : vector<8x128xf32>
    %c0_12 = arith.constant 0 : index
    %c0_13 = arith.constant 0 : index
    %15 = vector.load %arg6[%c0_12, %c0_13] : memref<3x8xf32, #tpu.memory_space<vmem>>, vector<3x8xf32>
    %cst_14 = arith.constant dense<0.000000e+00> : vector<3x128xf32>
    %16 = tpu.matmul %15, %14, %cst_14 {dimension_numbers = #tpu.dot_dimension_numbers<[1], [0], [0], [1], [0, 0, 1, 1], [], []>} : vector<3x8xf32>, vector<8x128xf32>, vector<3x128xf32> -> vector<3x128xf32>
    %c0_15 = arith.constant 0 : index
    %c0_16 = arith.constant 0 : index
    %17 = vector.load %arg7[%c0_15, %c0_16] : memref<3x1xf32, #tpu.memory_space<vmem>>, vector<3x1xf32>
    %18 = vector.broadcast %17 : vector<3x1xf32> to vector<3x128xf32>
    %19 = arith.addf %16, %18 : vector<3x128xf32>
    %c0_17 = arith.constant 0 : index
    %c0_18 = arith.constant 0 : index
    %20 = vector.load %arg8[%c0_17, %c0_18] : memref<3x128xf32, #tpu.memory_space<vmem>>, vector<3x128xf32>
    tpu.vector_store %arg8[%c0_17, %c0_18], %19 {strides = array<i32>} : memref<3x128xf32, #tpu.memory_space<vmem>>, vector<3x128xf32>,
    return
  }
  func.func @transform_0(%arg0: i32) -> (i32, i32) {
    %c0_i32 = arith.constant 0 : i32
    %c0_i32_0 = arith.constant 0 : i32
    return %c0_i32, %arg0 : i32, i32
  }
  func.func @transform_1(%arg0: i32) -> (i32, i32) {
    %c0_i32 = arith.constant 0 : i32
    %c0_i32_0 = arith.constant 0 : i32
    %c0_i32_1 = arith.constant 0 : i32
    return %c0_i32, %c0_i32_0 : i32, i32
  }
  func.func @transform_2(%arg0: i32) -> (i32, i32) {
    %c0_i32 = arith.constant 0 : i32
    %c0_i32_0 = arith.constant 0 : i32
    %c0_i32_1 = arith.constant 0 : i32
    return %c0_i32, %c0_i32_0 : i32, i32
  }
  func.func @transform_3(%arg0: i32) -> (i32, i32) {
    %c0_i32 = arith.constant 0 : i32
    %c0_i32_0 = arith.constant 0 : i32
    %c0_i32_1 = arith.constant 0 : i32
    return %c0_i32, %c0_i32_0 : i32, i32
  }
  func.func @transform_4(%arg0: i32) -> (i32, i32) {
    %c0_i32 = arith.constant 0 : i32
    %c0_i32_0 = arith.constant 0 : i32
    %c0_i32_1 = arith.constant 0 : i32
    return %c0_i32, %c0_i32_0 : i32, i32
  }
  func.func @transform_5(%arg0: i32) -> (i32, i32) {
    %c0_i32 = arith.constant 0 : i32
    %c0_i32_0 = arith.constant 0 : i32
    %c0_i32_1 = arith.constant 0 : i32
    return %c0_i32, %c0_i32_0 : i32, i32
  }
  func.func @transform_6(%arg0: i32) -> (i32, i32) {
    %c0_i32 = arith.constant 0 : i32
    %c0_i32_0 = arith.constant 0 : i32
    %c0_i32_1 = arith.constant 0 : i32
    return %c0_i32, %c0_i32_0 : i32, i32
  }
  func.func @transform_7(%arg0: i32) -> (i32, i32) {
    %c0_i32 = arith.constant 0 : i32
    %c0_i32_0 = arith.constant 0 : i32
    return %c0_i32, %arg0 : i32, i32
  }
}

</mosaic_0001>

<llo_original>
// kernel: tpu_custom_call.1
$region0: #{tpu_custom_call.1}
  #allocation0 [shape = 'u32[]', space=smem, size = 0x4, offset = 0x4, fixed_abs, tag = 'smem constant byte address 0x4 - core index']
  #allocation1 [shape = 'u32[72,128]{1,0:T(1,128)}', space=vmem, size = 0x9000, scoped, tag = 'internal scratch']
  %s0 = inlined_call_operand.vmem [shape: f32[4,128], index: 0, kind: input, shape index: {}]
  %s1 = inlined_call_operand.vmem [shape: f32[16,4], index: 1, kind: input, shape index: {}]
  %s2 = inlined_call_operand.vmem [shape: f32[16,1], index: 2, kind: input, shape index: {}]
  %s3 = inlined_call_operand.vmem [shape: f32[8,16], index: 3, kind: input, shape index: {}]
  %s4 = inlined_call_operand.vmem [shape: f32[8,1], index: 4, kind: input, shape index: {}]
  %s5 = inlined_call_operand.vmem [shape: f32[3,8], index: 5, kind: input, shape index: {}]
  %s6 = inlined_call_operand.vmem [shape: f32[3,1], index: 6, kind: input, shape index: {}]
  %s7 = inlined_call_operand.hbm [shape: f32[3,128], index: 7, kind: output, shape index: {}]
  %s8 = sld [smem:[#allocation0]]
  $region38: #{tpu_custom_call.1} parent=0
    _
  %s10 = ssub.s32 1, %s8
  %s11 = scalar_select 0, %s10, %s8
  $region1: #{tpu_custom_call.1} parent=0
    #allocation2 [shape = 'u8[2048]{0}', space=vmem, size = 0x800, scoped, tag = 'output window, operand 0, single buffered']
    #allocation3 [shape = 's32[1]{0}', space=sflag, size = 0x4, scoped, tag = 'scoped memory for tpu_custom_call.1']
    %12 = vsyncpa [#allocation3], 0
    // Predicated region
    $region2: #{tpu_custom_call.1} parent=1 // pred_check
      _
    $region3: #{tpu_custom_call.1} parent=1 // pred_check_branch
      %14 = sbr.rel (0) target = $region5
    $region4: #{tpu_custom_call.1} parent=1 // pred_region
      _
    $region5: #{tpu_custom_call.1} parent=1 // pred_fallthru
      _
    // Predicated region
    $region6: #{tpu_custom_call.1} parent=1 // pred_check
      _
    $region7: #{tpu_custom_call.1} parent=1 // pred_check_branch
      %16 = sbr.rel (0) target = $region9
    $region8: #{tpu_custom_call.1} parent=1 // pred_region
      _
    $region9: #{tpu_custom_call.1} parent=1 // pred_fallthru
      _
    // Predicated region
    $region10: #{tpu_custom_call.1} parent=1 // pred_check
      _
    $region11: #{tpu_custom_call.1} parent=1 // pred_check_branch
      %18 = sbr.rel (0) target = $region13
    $region12: #{tpu_custom_call.1} parent=1 // pred_region
      _
    $region13: #{tpu_custom_call.1} parent=1 // pred_fallthru
      _
    // Predicated region
    $region14: #{tpu_custom_call.1} parent=1 // pred_check
      _
    $region15: #{tpu_custom_call.1} parent=1 // pred_check_branch
      %20 = sbr.rel (0) target = $region17
    $region16: #{tpu_custom_call.1} parent=1 // pred_region
      _
    $region17: #{tpu_custom_call.1} parent=1 // pred_fallthru
      _
    // Predicated region
    $region18: #{tpu_custom_call.1} parent=1 // pred_check
      _
    $region19: #{tpu_custom_call.1} parent=1 // pred_check_branch
      %22 = sbr.rel (0) target = $region21
    $region20: #{tpu_custom_call.1} parent=1 // pred_region
      _
    $region21: #{tpu_custom_call.1} parent=1 // pred_fallthru
      _
    // Predicated region
    $region22: #{tpu_custom_call.1} parent=1 // pred_check
      _
    $region23: #{tpu_custom_call.1} parent=1 // pred_check_branch
      %24 = sbr.rel (0) target = $region25
    $region24: #{tpu_custom_call.1} parent=1 // pred_region
      _
    $region25: #{tpu_custom_call.1} parent=1 // pred_fallthru
      _
    // Predicated region
    $region26: #{tpu_custom_call.1} parent=1 // pred_check
      _
    $region27: #{tpu_custom_call.1} parent=1 // pred_check_branch
      %26 = sbr.rel (0) target = $region29
    $region28: #{tpu_custom_call.1} parent=1 // pred_region
      _
    $region29: #{tpu_custom_call.1} parent=1 // pred_fallthru
      _
    %v27 = vld [vmem:[%s0] sm:$0xf]
    %v28 = vld [vmem:[%s1] sm:$0xff]
    %v29 = vld [vmem:[%s1 + $0x8] sm:$0xff]
    %v30 = vld [vmem:[%s2] sm:$0xff]
    %v31 = vld [vmem:[%s2 + $0x8] sm:$0xff]
    %33 = vset.pattern.permute.xlu0 0
    %34 = vperm.xlu0 %33, %v30
    %v35 = vpop.permute.xlu0 %34
    %38 = vset.pattern.permute.xlu0 0
    %39 = vperm.xlu0 %38, %v31
    %v40 = vpop.permute.xlu0 %39
    %vm42 = vcmask 31744
    %v44 = vsel %vm42, %v28, 0
    %v47 = vsel %vm42, %v29, 0
    %vm49 = vcmask 1043456
    %v51 = vsel %vm49, %v27, 0
    %53 = vmatpush.msra.mxu0 0.0
    %54 = vmatpush.msra.mxu0 0.0
    %55 = vmatpush.msra.mxu0 0.0
    %56 = vmatpush.msra.mxu0 0.0
    %57 = vmatpush.msra.mxu0 0.0
    %58 = vmatpush.msra.mxu0 0.0
    %59 = vmatpush.msra.mxu0 0.0
    %60 = vmatpush.msra.mxu0 0.0
    %61 = vmatpush.msra.mxu0 0.0
    %62 = vmatpush.msra.mxu0 0.0
    %63 = vmatpush.msra.mxu0 0.0
    %64 = vmatpush.msra.mxu0 0.0
    %65 = vmatpush.msra.mxu0 0.0
    %66 = vmatpush.msra.mxu0 0.0
    %67 = vmatpush.msra.mxu0 0.0
    %68 = vmatpush.msra.mxu0 %v51
    %69 = vmatmul.f32.gmra.mxu0 %v44
    %v70 = vpop.f32.mrf.mxu0
    %v71 = vadd.f32 %v35, %v70
    %72 = vmatmul.f32.gmra.mxu0 %v47
    %v73 = vpop.f32.mrf.mxu0
    %v74 = vadd.f32 %v40, %v73
    %75 = vdwg.mxu0
    %v76 = vmax.f32 %v71, 0.0
    %v77 = vmax.f32 %v74, 0.0
    %v78 = vld [vmem:[%s3] sm:$0xff]
    %v79 = vld [vmem:[%s4] sm:$0xff]
    %81 = vset.pattern.permute.xlu0 0
    %82 = vperm.xlu0 %81, %v79
    %v83 = vpop.permute.xlu0 %82
    %vm85 = vcmask 130048
    %v87 = vsel %vm85, %v78, 0
    %89 = vmatpush.msra.mxu0 0.0
    %90 = vmatpush.msra.mxu0 0.0
    %91 = vmatpush.msra.mxu0 0.0
    %92 = vmatpush.msra.mxu0 0.0
    %93 = vmatpush.msra.mxu0 0.0
    %94 = vmatpush.msra.mxu0 0.0
    %95 = vmatpush.msra.mxu0 0.0
    %96 = vmatpush.msra.mxu0 0.0
    %97 = vmatpush.msra.mxu0 0.0
    %98 = vmatpush.msra.mxu0 0.0
    %99 = vmatpush.msra.mxu0 0.0
    %100 = vmatpush.msra.mxu0 0.0
    %101 = vmatpush.msra.mxu0 0.0
    %102 = vmatpush.msra.mxu0 0.0
    %103 = vmatpush.msra.mxu0 %v77
    %104 = vmatpush.msra.mxu0 %v76
    %105 = vmatmul.f32.gmra.mxu0 %v87
    %v106 = vpop.f32.mrf.mxu0
    %v107 = vadd.f32 %v83, %v106
    %108 = vdwg.mxu0
    %v109 = vmax.f32 %v107, 0.0
    %v110 = vld [vmem:[%s5] sm:$0x7]
    %v111 = vld [vmem:[%s6] sm:$0x7]
    %113 = vset.pattern.permute.xlu0 0
    %114 = vperm.xlu0 %113, %v111
    %v115 = vpop.permute.xlu0 %114
    %vm117 = vcmask 64512
    %v119 = vsel %vm117, %v110, 0
    %121 = vmatpush.msra.mxu0 0.0
    %122 = vmatpush.msra.mxu0 0.0
    %123 = vmatpush.msra.mxu0 0.0
    %124 = vmatpush.msra.mxu0 0.0
    %125 = vmatpush.msra.mxu0 0.0
    %126 = vmatpush.msra.mxu0 0.0
    %127 = vmatpush.msra.mxu0 0.0
    %128 = vmatpush.msra.mxu0 0.0
    %129 = vmatpush.msra.mxu0 0.0
    %130 = vmatpush.msra.mxu0 0.0
    %131 = vmatpush.msra.mxu0 0.0
    %132 = vmatpush.msra.mxu0 0.0
    %133 = vmatpush.msra.mxu0 0.0
    %134 = vmatpush.msra.mxu0 0.0
    %135 = vmatpush.msra.mxu0 0.0
    %136 = vmatpush.msra.mxu0 %v109
    %137 = vmatmul.f32.gmra.mxu0 %v119
    %v138 = vpop.f32.mrf.mxu0
    %v139 = vadd.f32 %v115, %v138
    %140 = vdwg.mxu0
    %141 = vst [vmem:[#allocation2] sm:$0x7] %v139
    // Predicated region
    $region30: #{tpu_custom_call.1} parent=1 // pred_check
      _
    $region31: #{tpu_custom_call.1} parent=1 // pred_check_branch
      %143 = sbr.rel (0) target = $region33
    $region32: #{tpu_custom_call.1} parent=1 // pred_region
      %145 = vsyncadd [#allocation3], 0
      %s147 = sshll.u32 [#allocation2], 4
      %s148 = int_to_ptr.vmem [resolvable:$true] %s147
      %s149 = sshll.u32 %s7, 4
      %s150 = int_to_ptr.hbm [resolvable:$true] %s149
      %152 = dma.vmem_to_hbm [thread:$0]  %s148, 64, %s150, [#allocation3]
    $region33: #{tpu_custom_call.1} parent=1 // pred_fallthru
      _
    // Predicated region
    $region34: #{tpu_custom_call.1} parent=1 // pred_check
      _
    $region35: #{tpu_custom_call.1} parent=1 // pred_check_branch
      %154 = sbr.rel (0) target = $region37
    $region36: #{tpu_custom_call.1} parent=1 // pred_region
      %156 = dma.done [#allocation3], 64
    $region37: #{tpu_custom_call.1} parent=1 // pred_fallthru
      _
    %157 = vsyncpa [#allocation3], 1

</llo_original>
